<compile_context>
chip_gen: v6e
topology: v6e:2x2x1
jax: 0.10.0
libtpu: 0.0.40
codegen_flags: <defaults>
</compile_context>

<pallas_src>
import functools

import jax
import jax.numpy as jnp
from jax import lax
from jax.experimental import pallas as pl
from jax.experimental.pallas import tpu as pltpu

EPS = 1e-5
LANE = 128
SUBLANE = 8
DEFAULT_TILE_M = 512                   # per-generation sweep: v5e/v6e may try 1024 for small-K layers
VMEM_LIMIT_BYTES = 32 * 1024 * 1024    # explicit scoped-VMEM budget (>= v5e default, <= v6e/v7x default)


def _round_up(x, m):
    return (x + m - 1) // m * m


def _choose_m_tiling(m, tile_m):
    m8 = _round_up(m, SUBLANE)
    tm = _round_up(min(tile_m, m8), SUBLANE)
    return tm, _round_up(m8, tm)


# ----------------------------------------------------------------------------
# Pass 1: y = patches @ W (MXU, bf16 operands, f32 accumulation), y emitted once
# as bf16, plus per-tile/per-sublane BN-stat partials.  Grid axis is "parallel".
# ----------------------------------------------------------------------------
def _matmul_stats_kernel(p_ref, w_ref, y_ref, sum_ref, sq_ref):
    y = jnp.dot(p_ref[...], w_ref[...], preferred_element_type=jnp.float32)
    y_ref[...] = y.astype(y_ref.dtype)
    yg = y.reshape(-1, SUBLANE, y.shape[-1])          # (tm/8, 8, cp): per-sublane partials
    sum_ref[...] = jnp.sum(yg, axis=0)
    sq_ref[...] = jnp.sum(yg * yg, axis=0)


# ----------------------------------------------------------------------------
# Pass 2: purely elementwise BN apply (+residual) (+full or column-masked ReLU).
# Reads the bf16 y written by pass 1 instead of recomputing patches @ W.
# ----------------------------------------------------------------------------
def _bn_apply_kernel(relu_cols, has_residual, *refs):
    if has_residual:
        y_ref, scale_ref, shift_ref, res_ref, out_ref = refs
    else:
        y_ref, scale_ref, shift_ref, out_ref = refs
        res_ref = None

    y = y_ref[...].astype(jnp.float32) * scale_ref[...] + shift_ref[...]
    if has_residual:
        y = y + res_ref[...].astype(jnp.float32)
    if relu_cols is None:                              # ReLU on every column
        y = jnp.maximum(y, 0.0)
    else:                                              # ReLU only on the first `relu_cols` columns
        col = lax.broadcasted_iota(jnp.int32, y.shape, 1)
        y = jnp.where(col < relu_cols, jnp.maximum(y, 0.0), y)
    out_ref[...] = y.astype(out_ref.dtype)


def fused_conv_bn(patches, w_mat, gamma, beta, *, residual=None, relu_cols=None,
                  out_dtype=jnp.float32, tile_m=DEFAULT_TILE_M):
    """Training-mode conv-as-matmul + BatchNorm (+residual) (+ReLU), single matmul pass.

    patches : (M, Kp) bf16, K already zero-padded to a multiple of 128 (see im2col_bf16).
    w_mat   : (K, C) f32 weight matrix matching the im2col column order (K <= Kp).
    gamma/beta : (C,) BN affine parameters.
    residual   : optional (M, C) tensor added before the ReLU (read as bf16, added in f32).
    relu_cols  : None -> ReLU every column; int n -> ReLU only columns < n (used when a
                 no-ReLU skip branch is packed into the trailing output columns).
    Returns the (Mp, Cp) lane-padded output in `out_dtype`; callers slice what they need.
    """
    m, kp = patches.shape
    assert kp % LANE == 0
    k, c = w_mat.shape
    assert k <= kp
    cp = _round_up(c, LANE)
    tm, mp = _choose_m_tiling(m, tile_m)
    n_tiles = mp // tm

    p = patches if mp == m else jnp.pad(patches, ((0, mp - m), (0, 0)))
    w = jnp.pad(w_mat.astype(jnp.bfloat16), ((0, kp - k), (0, cp - c)))

    def pinned(shape):
        # Block resident across all M tiles (index map ignores the tile index).
        # TODO(synk): pipeline_mode=pl.Buffered(1) here would drop the pointless second
        #             buffer for the pinned weight on VMEM-tight deep layers.
        return pl.BlockSpec(shape, lambda i: (0, 0))

    def tiled(cols, rows=None):
        r = tm if rows is None else rows
        return pl.BlockSpec((r, cols), lambda i: (i, 0))

    cparams = pltpu.CompilerParams(dimension_semantics=("parallel",),
                                   vmem_limit_bytes=VMEM_LIMIT_BYTES)

    # --- pass 1: matmul + batch-stat partials (y materialized once, in bf16) ------------
    flops = 2 * mp * kp * cp
    bytes_p1 = p.size * 2 + w.size * 2 + mp * cp * 2 + 2 * n_tiles * SUBLANE * cp * 4
    y, sums, sqs = pl.pallas_call(
        _matmul_stats_kernel,
        grid=(n_tiles,),
        in_specs=[tiled(kp), pinned((kp, cp))],
        out_specs=[tiled(cp), tiled(cp, rows=SUBLANE), tiled(cp, rows=SUBLANE)],
        out_shape=[jax.ShapeDtypeStruct((mp, cp), jnp.bfloat16),
                   jax.ShapeDtypeStruct((n_tiles * SUBLANE, cp), jnp.float32),
                   jax.ShapeDtypeStruct((n_tiles * SUBLANE, cp), jnp.float32)],
        compiler_params=cparams,
        cost_estimate=pl.CostEstimate(flops=flops, transcendentals=0,
                                      bytes_accessed=bytes_p1),
    )(p, w)

    # --- glue: fold batch statistics + gamma/beta into per-channel scale/shift (f32) ----
    # Zero-padded rows/columns contribute 0 to both partial sums, so divide by the true M.
    mean = jnp.sum(sums, axis=0) / m
    ex2 = jnp.sum(sqs, axis=0) / m
    var = jnp.maximum(ex2 - mean * mean, 0.0)          # guard f32 cancellation
    inv_std = lax.rsqrt(var + EPS)
    gamma_p = jnp.pad(gamma.astype(jnp.float32), (0, cp - c))
    beta_p = jnp.pad(beta.astype(jnp.float32), (0, cp - c))
    scale = (gamma_p * inv_std).reshape(1, cp)
    shift = (beta_p - mean * gamma_p * inv_std).reshape(1, cp)

    # --- pass 2: elementwise BN apply (+residual) (+ReLU), streamed per M tile ----------
    args = [y, scale, shift]
    in_specs = [tiled(cp), pinned((1, cp)), pinned((1, cp))]
    out_bytes = mp * cp * jnp.dtype(out_dtype).itemsize
    bytes_p2 = mp * cp * 2 + 2 * cp * 4 + out_bytes
    if residual is not None:
        res = jnp.pad(residual.astype(jnp.bfloat16),
                      ((0, mp - residual.shape[0]), (0, cp - residual.shape[1])))
        args.append(res)
        in_specs.append(tiled(cp))
        bytes_p2 += mp * cp * 2
    # y is dead after this pass; reuse its HBM buffer for the output when dtypes match.
    aliases = {0: 0} if jnp.dtype(out_dtype) == jnp.dtype(jnp.bfloat16) else {}

    out = pl.pallas_call(
        functools.partial(_bn_apply_kernel, relu_cols, residual is not None),
        grid=(n_tiles,),
        in_specs=in_specs,
        out_specs=tiled(cp),
        out_shape=jax.ShapeDtypeStruct((mp, cp), out_dtype),
        input_output_aliases=aliases,
        compiler_params=cparams,
        cost_estimate=pl.CostEstimate(flops=3 * mp * cp, transcendentals=0,
                                      bytes_accessed=bytes_p2),
    )(*args)
    return out


# ----------------------------------------------------------------------------
# Glue: im2col (plain JAX, single bf16 materialization), weight reshaping, block forward
# ----------------------------------------------------------------------------
def im2col_bf16(x_nhwc, k, stride, pad):
    """im2col with the bf16 cast and K lane-padding fused into the one patch materialization."""
    # TODO(synk): replace with an in-kernel 9-tap matmul over a manually DMA'd NHWC slab
    #             to eliminate the 9x-amplified HBM patch array entirely.
    N, H, W, C = x_nhwc.shape
    xp = jnp.pad(x_nhwc, ((0, 0), (pad, pad), (pad, pad), (0, 0))).astype(jnp.bfloat16)
    Ho = (H + 2 * pad - k) // stride + 1
    Wo = (W + 2 * pad - k) // stride + 1
    cols = []
    for dy in range(k):
        for dx in range(k):
            cols.append(xp[:, dy:dy + Ho * stride:stride, dx:dx + Wo * stride:stride, :])
    kp = _round_up(k * k * C, LANE)
    if kp > k * k * C:
        cols.append(jnp.zeros((N, Ho, Wo, kp - k * k * C), jnp.bfloat16))
    patches = jnp.concatenate(cols, axis=-1)           # (N, Ho, Wo, Kp), bf16, lane-padded
    return patches.reshape(N * Ho * Wo, kp), Ho, Wo


def _to_matmul_weight(w_oihw):
    # (Cout, Cin, kh, kw) -> (kh*kw*Cin, Cout), matching the im2col column ordering.
    cout = w_oihw.shape[0]
    return jnp.transpose(w_oihw, (2, 3, 1, 0)).reshape(-1, cout)


def block_forward(x_nhwc, params, stride, tile_m=DEFAULT_TILE_M):
    N, H, W, Cin = x_nhwc.shape
    Cout = params["conv1_w"].shape[0]
    has_conv_skip = (stride != 1) or (Cin != Cout)

    # conv1 (+ folded 1x1-conv skip) -> BN -> ReLU (on the conv1 half only)
    p1, Ho, Wo = im2col_bf16(x_nhwc, 3, stride, 1)
    m = N * Ho * Wo
    w1 = _to_matmul_weight(params["conv1_w"])                       # (9*Cin, Cout)

    if has_conv_skip:
        # The 1x1 stride-s skip conv reads exactly the centre tap of the conv1 patches, so
        # its weight is appended as extra output columns (zero off the centre-tap rows):
        # one matmul produces [conv1 | skip] and the per-column BN stats separate cleanly.
        w_skip = _to_matmul_weight(params["skip_w"])                # (Cin, Cout)
        ctr = (1 * 3 + 1) * Cin
        w_skip_exp = jnp.zeros_like(w1).at[ctr:ctr + Cin, :].set(w_skip)
        w_big = jnp.concatenate([w1, w_skip_exp], axis=1)           # (9*Cin, 2*Cout)
        gamma = jnp.concatenate([params["bn1_g"], params["bn_s_g"]])
        beta = jnp.concatenate([params["bn1_b"], params["bn_s_b"]])
        fused1 = fused_conv_bn(p1, w_big, gamma, beta, relu_cols=Cout,
                               out_dtype=jnp.bfloat16, tile_m=tile_m)
        h1 = fused1[:m, :Cout]                                      # relu(bn1(conv1(x))), bf16
        skip = fused1[:m, Cout:2 * Cout]                            # bn_s(conv1x1(x)), bf16
    else:
        fused1 = fused_conv_bn(p1, w1, params["bn1_g"], params["bn1_b"], relu_cols=None,
                               out_dtype=jnp.bfloat16, tile_m=tile_m)
        h1 = fused1[:m, :Cout]
        skip = x_nhwc.reshape(m, Cout).astype(jnp.bfloat16)         # identity skip

    # conv2 -> BN -> (+skip) -> ReLU   (residual add + ReLU fused into the BN-apply pass)
    p2, _, _ = im2col_bf16(h1.reshape(N, Ho, Wo, Cout), 3, 1, 1)
    out = fused_conv_bn(p2, _to_matmul_weight(params["conv2_w"]),
                        params["bn2_g"], params["bn2_b"],
                        residual=skip, relu_cols=None,
                        out_dtype=jnp.float32, tile_m=tile_m)
    return out[:m, :Cout].reshape(N, Ho, Wo, Cout)


# ----------------------------------------------------------------------------
# Pure-JAX reference (no Pallas, all f32) for a sanity check
# ----------------------------------------------------------------------------
def ref_block(x_nhwc, params, stride):
    def conv(x, w_oihw, s, pad):
        w_hwio = jnp.transpose(w_oihw, (2, 3, 1, 0))
        return lax.conv_general_dilated(
            x, w_hwio, (s, s), [(pad, pad), (pad, pad)],
            dimension_numbers=("NHWC", "HWIO", "NHWC"))

    def bn(y, g, b):
        mean = jnp.mean(y, axis=(0, 1, 2), keepdims=True)
        var = jnp.mean(jnp.square(y - mean), axis=(0, 1, 2), keepdims=True)
        return (y - mean) * lax.rsqrt(var + EPS) * g + b

    h = jax.nn.relu(bn(conv(x_nhwc, params["conv1_w"], stride, 1),
                       params["bn1_g"], params["bn1_b"]))
    h = bn(conv(h, params["conv2_w"], 1, 1), params["bn2_g"], params["bn2_b"])
    Cout = params["conv1_w"].shape[0]
    if stride != 1 or x_nhwc.shape[-1] != Cout:
        s = bn(conv(x_nhwc, params["skip_w"], stride, 0), params["bn_s_g"], params["bn_s_b"])
    else:
        s = x_nhwc
    return jax.nn.relu(h + s)


def _run_case(key, N, Cin, Cout, H, W, stride, tile_m):
    k1, k2, k3, k4 = jax.random.split(key, 4)
    x_nchw = jax.random.normal(k1, (N, Cin, H, W), jnp.float32)      # PyTorch-style NCHW input
    ar = jnp.arange(Cout, dtype=jnp.float32)
    params = {
        "conv1_w": 0.2 * jax.random.normal(k2, (Cout, Cin, 3, 3), jnp.float32),
        "conv2_w": 0.2 * jax.random.normal(k3, (Cout, Cout, 3, 3), jnp.float32),
        "bn1_g": 1.0 + 0.05 * ar, "bn1_b": 0.01 * ar,
        "bn2_g": 1.0 - 0.03 * ar, "bn2_b": -0.02 * ar,
    }
    if stride != 1 or Cin != Cout:
        params["skip_w"] = 0.2 * jax.random.normal(k4, (Cout, Cin, 1, 1), jnp.float32)
        params["bn_s_g"] = 1.0 + 0.02 * ar
        params["bn_s_b"] = 0.005 * ar

    x_nhwc = jnp.transpose(x_nchw, (0, 2, 3, 1))                     # NCHW -> NHWC
    block_fn = jax.jit(functools.partial(block_forward, stride=stride, tile_m=tile_m))
    out = jax.block_until_ready(block_fn(x_nhwc, params))

    Ho = (H + 2 - 3) // stride + 1
    Wo = (W + 2 - 3) // stride + 1
    assert out.shape == (N, Ho, Wo, Cout), out.shape
    assert bool(jnp.isfinite(out).all())

    ref = ref_block(x_nhwc, params, stride)
    err = jnp.abs(out - ref)
    max_err = float(jnp.max(err))
    mean_err = float(jnp.mean(err))
    # bf16 MXU operands + bf16 intermediate/skip introduce ~1e-2-level noise vs the all-f32
    # reference; real bugs show O(1) errors.  Tightened vs the previous 1e-1 tolerance.
    assert max_err < 7e-2, f"max mismatch vs reference: {max_err}"
    assert mean_err < 2e-2, f"mean mismatch vs reference: {mean_err}"


if __name__ == "__main__":
    key = jax.random.PRNGKey(0)
    ka, kb = jax.random.split(key)
    # Case 1: stride != 1 and in_ch != out_ch -> exercises the folded 1x1-conv+BN skip and
    # the masked-ReLU / multi-tile stats path (M = 128, tile_m = 64 -> 2 tiles).
    _run_case(ka, N=2, Cin=4, Cout=8, H=16, W=16, stride=2, tile_m=64)
    # Case 2: identity skip (stride=1, in_ch == out_ch), larger M (512 -> 8 tiles).
    _run_case(kb, N=2, Cin=8, Cout=8, H=16, W=16, stride=1, tile_m=64)

    print("KERNEL_OK")
</pallas_src>

<mosaic_0001>
module attributes {stable_mosaic.version = 11 : i64} {
  func.func @_matmul_stats_kernel(%arg0: i32, %arg1: memref<64x128xbf16, #tpu.memory_space<vmem>>, %arg2: memref<128x128xbf16, #tpu.memory_space<vmem>>, %arg3: memref<64x128xbf16, #tpu.memory_space<vmem>>, %arg4: memref<8x128xf32, #tpu.memory_space<vmem>>, %arg5: memref<8x128xf32, #tpu.memory_space<vmem>>) attributes {dimension_semantics = [#tpu.dimension_semantics<parallel>], iteration_bounds = array<i64: 2>, scalar_prefetch = 0 : i64, scratch_operands = 0 : i64, tpu.core_type = #tpu.core_type<tc>, window_params = [{transform_indices = @transform_0, window_bounds = array<i64: 64, 128>}, {pipeline_mode = #tpu.pipeline_mode<synchronous>, transform_indices = @transform_1, window_bounds = array<i64: 128, 128>}, {transform_indices = @transform_2, window_bounds = array<i64: 64, 128>}, {transform_indices = @transform_3, window_bounds = array<i64: 8, 128>}, {transform_indices = @transform_4, window_bounds = array<i64: 8, 128>}]} {
    %c0 = arith.constant 0 : index
    %c0_0 = arith.constant 0 : index
    %0 = vector.load %arg1[%c0, %c0_0] : memref<64x128xbf16, #tpu.memory_space<vmem>>, vector<64x128xbf16>
    %c0_1 = arith.constant 0 : index
    %c0_2 = arith.constant 0 : index
    %1 = vector.load %arg2[%c0_1, %c0_2] : memref<128x128xbf16, #tpu.memory_space<vmem>>, vector<128x128xbf16>
    %cst = arith.constant dense<0.000000e+00> : vector<64x128xf32>
    %2 = tpu.matmul %0, %1, %cst {dimension_numbers = #tpu.dot_dimension_numbers<[1], [0], [0], [1], [0, 0, 1, 1], [], []>} : vector<64x128xbf16>, vector<128x128xbf16>, vector<64x128xf32> -> vector<64x128xf32>
    %3 = arith.truncf %2 : vector<64x128xf32> to vector<64x128xbf16>
    %c0_3 = arith.constant 0 : index
    %c0_4 = arith.constant 0 : index
    %4 = vector.load %arg3[%c0_3, %c0_4] : memref<64x128xbf16, #tpu.memory_space<vmem>>, vector<64x128xbf16>
    tpu.vector_store %arg3[%c0_3, %c0_4], %3 {strides = array<i32>} : memref<64x128xbf16, #tpu.memory_space<vmem>>, vector<64x128xbf16>,
    %5 = vector.shape_cast %2 : vector<64x128xf32> to vector<8x8x128xf32>
    %cst_5 = arith.constant dense<0.000000e+00> : vector<8x128xf32>
    %6 = vector.multi_reduction <add>, %5, %cst_5 [0] : vector<8x8x128xf32> to vector<8x128xf32>
    %c0_6 = arith.constant 0 : index
    %c0_7 = arith.constant 0 : index
    %7 = vector.load %arg4[%c0_6, %c0_7] : memref<8x128xf32, #tpu.memory_space<vmem>>, vector<8x128xf32>
    tpu.vector_store %arg4[%c0_6, %c0_7], %6 {strides = array<i32>} : memref<8x128xf32, #tpu.memory_space<vmem>>, vector<8x128xf32>,
    %8 = arith.mulf %5, %5 : vector<8x8x128xf32>
    %cst_8 = arith.constant dense<0.000000e+00> : vector<8x128xf32>
    %9 = vector.multi_reduction <add>, %8, %cst_8 [0] : vector<8x8x128xf32> to vector<8x128xf32>
    %c0_9 = arith.constant 0 : index
    %c0_10 = arith.constant 0 : index
    %10 = vector.load %arg5[%c0_9, %c0_10] : memref<8x128xf32, #tpu.memory_space<vmem>>, vector<8x128xf32>
    tpu.vector_store %arg5[%c0_9, %c0_10], %9 {strides = array<i32>} : memref<8x128xf32, #tpu.memory_space<vmem>>, vector<8x128xf32>,
    return
  }
  func.func @transform_0(%arg0: i32) -> (i32, i32) {
    %c0_i32 = arith.constant 0 : i32
    %c0_i32_0 = arith.constant 0 : i32
    return %arg0, %c0_i32 : i32, i32
  }
  func.func @transform_1(%arg0: i32) -> (i32, i32) {
    %c0_i32 = arith.constant 0 : i32
    %c0_i32_0 = arith.constant 0 : i32
    %c0_i32_1 = arith.constant 0 : i32
    return %c0_i32, %c0_i32_0 : i32, i32
  }
  func.func @transform_2(%arg0: i32) -> (i32, i32) {
    %c0_i32 = arith.constant 0 : i32
    %c0_i32_0 = arith.constant 0 : i32
    return %arg0, %c0_i32 : i32, i32
  }
  func.func @transform_3(%arg0: i32) -> (i32, i32) {
    %c0_i32 = arith.constant 0 : i32
    %c0_i32_0 = arith.constant 0 : i32
    return %arg0, %c0_i32 : i32, i32
  }
  func.func @transform_4(%arg0: i32) -> (i32, i32) {
    %c0_i32 = arith.constant 0 : i32
    %c0_i32_0 = arith.constant 0 : i32
    return %arg0, %c0_i32 : i32, i32
  }
}

module attributes {stable_mosaic.version = 11 : i64} {
  func.func @_bn_apply_kernel(%arg0: i32, %arg1: memref<64x128xbf16, #tpu.memory_space<vmem>>, %arg2: memref<1x128xf32, #tpu.memory_space<vmem>>, %arg3: memref<1x128xf32, #tpu.memory_space<vmem>>, %arg4: memref<64x128xbf16, #tpu.memory_space<vmem>>) attributes {dimension_semantics = [#tpu.dimension_semantics<parallel>], iteration_bounds = array<i64: 2>, scalar_prefetch = 0 : i64, scratch_operands = 0 : i64, tpu.core_type = #tpu.core_type<tc>, window_params = [{transform_indices = @transform_0, window_bounds = array<i64: 64, 128>}, {pipeline_mode = #tpu.pipeline_mode<synchronous>, transform_indices = @transform_1, window_bounds = array<i64: 1, 128>}, {pipeline_mode = #tpu.pipeline_mode<synchronous>, transform_indices = @transform_2, window_bounds = array<i64: 1, 128>}, {transform_indices = @transform_3, window_bounds = array<i64: 64, 128>}]} {
    %c0 = arith.constant 0 : index
    %c0_0 = arith.constant 0 : index
    %0 = vector.load %arg1[%c0, %c0_0] : memref<64x128xbf16, #tpu.memory_space<vmem>>, vector<64x128xbf16>
    %1 = arith.extf %0 : vector<64x128xbf16> to vector<64x128xf32>
    %c0_1 = arith.constant 0 : index
    %c0_2 = arith.constant 0 : index
    %2 = vector.load %arg2[%c0_1, %c0_2] : memref<1x128xf32, #tpu.memory_space<vmem>>, vector<1x128xf32>
    %3 = vector.broadcast %2 : vector<1x128xf32> to vector<64x128xf32>
    %4 = arith.mulf %1, %3 : vector<64x128xf32>
    %c0_3 = arith.constant 0 : index
    %c0_4 = arith.constant 0 : index
    %5 = vector.load %arg3[%c0_3, %c0_4] : memref<1x128xf32, #tpu.memory_space<vmem>>, vector<1x128xf32>
    %6 = vector.broadcast %5 : vector<1x128xf32> to vector<64x128xf32>
    %7 = arith.addf %4, %6 : vector<64x128xf32>
    %8 = tpu.iota {dimensions = array<i32: 1>} : vector<64x128xi32>
    %c8_i32 = arith.constant 8 : i32
    %9 = vector.broadcast %c8_i32 : i32 to vector<64x128xi32>
    %10 = arith.cmpi slt, %8, %9 : vector<64x128xi32>
    %cst = arith.constant 0.000000e+00 : f32
    %11 = vector.broadcast %cst : f32 to vector<64x128xf32>
    %12 = arith.maximumf %7, %11 : vector<64x128xf32>
    %13 = arith.select %10, %12, %7 : vector<64x128xi1>, vector<64x128xf32>
    %14 = arith.truncf %13 : vector<64x128xf32> to vector<64x128xbf16>
    %c0_5 = arith.constant 0 : index
    %c0_6 = arith.constant 0 : index
    %15 = vector.load %arg4[%c0_5, %c0_6] : memref<64x128xbf16, #tpu.memory_space<vmem>>, vector<64x128xbf16>
    tpu.vector_store %arg4[%c0_5, %c0_6], %14 {strides = array<i32>} : memref<64x128xbf16, #tpu.memory_space<vmem>>, vector<64x128xbf16>,
    return
  }
  func.func @transform_0(%arg0: i32) -> (i32, i32) {
    %c0_i32 = arith.constant 0 : i32
    %c0_i32_0 = arith.constant 0 : i32
    return %arg0, %c0_i32 : i32, i32
  }
  func.func @transform_1(%arg0: i32) -> (i32, i32) {
    %c0_i32 = arith.constant 0 : i32
    %c0_i32_0 = arith.constant 0 : i32
    %c0_i32_1 = arith.constant 0 : i32
    return %c0_i32, %c0_i32_0 : i32, i32
  }
  func.func @transform_2(%arg0: i32) -> (i32, i32) {
    %c0_i32 = arith.constant 0 : i32
    %c0_i32_0 = arith.constant 0 : i32
    %c0_i32_1 = arith.constant 0 : i32
    return %c0_i32, %c0_i32_0 : i32, i32
  }
  func.func @transform_3(%arg0: i32) -> (i32, i32) {
    %c0_i32 = arith.constant 0 : i32
    %c0_i32_0 = arith.constant 0 : i32
    return %arg0, %c0_i32 : i32, i32
  }
}

module attributes {stable_mosaic.version = 11 : i64} {
  func.func @_bn_apply_kernel(%arg0: i32, %arg1: memref<64x128xbf16, #tpu.memory_space<vmem>>, %arg2: memref<1x128xf32, #tpu.memory_space<vmem>>, %arg3: memref<1x128xf32, #tpu.memory_space<vmem>>, %arg4: memref<64x128xbf16, #tpu.memory_space<vmem>>, %arg5: memref<64x128xf32, #tpu.memory_space<vmem>>) attributes {dimension_semantics = [#tpu.dimension_semantics<parallel>], iteration_bounds = array<i64: 2>, scalar_prefetch = 0 : i64, scratch_operands = 0 : i64, tpu.core_type = #tpu.core_type<tc>, window_params = [{transform_indices = @transform_0, window_bounds = array<i64: 64, 128>}, {pipeline_mode = #tpu.pipeline_mode<synchronous>, transform_indices = @transform_1, window_bounds = array<i64: 1, 128>}, {pipeline_mode = #tpu.pipeline_mode<synchronous>, transform_indices = @transform_2, window_bounds = array<i64: 1, 128>}, {transform_indices = @transform_3, window_bounds = array<i64: 64, 128>}, {transform_indices = @transform_4, window_bounds = array<i64: 64, 128>}]} {
    %c0 = arith.constant 0 : index
    %c0_0 = arith.constant 0 : index
    %0 = vector.load %arg1[%c0, %c0_0] : memref<64x128xbf16, #tpu.memory_space<vmem>>, vector<64x128xbf16>
    %1 = arith.extf %0 : vector<64x128xbf16> to vector<64x128xf32>
    %c0_1 = arith.constant 0 : index
    %c0_2 = arith.constant 0 : index
    %2 = vector.load %arg2[%c0_1, %c0_2] : memref<1x128xf32, #tpu.memory_space<vmem>>, vector<1x128xf32>
    %3 = vector.broadcast %2 : vector<1x128xf32> to vector<64x128xf32>
    %4 = arith.mulf %1, %3 : vector<64x128xf32>
    %c0_3 = arith.constant 0 : index
    %c0_4 = arith.constant 0 : index
    %5 = vector.load %arg3[%c0_3, %c0_4] : memref<1x128xf32, #tpu.memory_space<vmem>>, vector<1x128xf32>
    %6 = vector.broadcast %5 : vector<1x128xf32> to vector<64x128xf32>
    %7 = arith.addf %4, %6 : vector<64x128xf32>
    %c0_5 = arith.constant 0 : index
    %c0_6 = arith.constant 0 : index
    %8 = vector.load %arg4[%c0_5, %c0_6] : memref<64x128xbf16, #tpu.memory_space<vmem>>, vector<64x128xbf16>
    %9 = arith.extf %8 : vector<64x128xbf16> to vector<64x128xf32>
    %10 = arith.addf %7, %9 : vector<64x128xf32>
    %cst = arith.constant 0.000000e+00 : f32
    %11 = vector.broadcast %cst : f32 to vector<64x128xf32>
    %12 = arith.maximumf %10, %11 : vector<64x128xf32>
    %c0_7 = arith.constant 0 : index
    %c0_8 = arith.constant 0 : index
    %13 = vector.load %arg5[%c0_7, %c0_8] : memref<64x128xf32, #tpu.memory_space<vmem>>, vector<64x128xf32>
    tpu.vector_store %arg5[%c0_7, %c0_8], %12 {strides = array<i32>} : memref<64x128xf32, #tpu.memory_space<vmem>>, vector<64x128xf32>,
    return
  }
  func.func @transform_0(%arg0: i32) -> (i32, i32) {
    %c0_i32 = arith.constant 0 : i32
    %c0_i32_0 = arith.constant 0 : i32
    return %arg0, %c0_i32 : i32, i32
  }
  func.func @transform_1(%arg0: i32) -> (i32, i32) {
    %c0_i32 = arith.constant 0 : i32
    %c0_i32_0 = arith.constant 0 : i32
    %c0_i32_1 = arith.constant 0 : i32
    return %c0_i32, %c0_i32_0 : i32, i32
  }
  func.func @transform_2(%arg0: i32) -> (i32, i32) {
    %c0_i32 = arith.constant 0 : i32
    %c0_i32_0 = arith.constant 0 : i32
    %c0_i32_1 = arith.constant 0 : i32
    return %c0_i32, %c0_i32_0 : i32, i32
  }
  func.func @transform_3(%arg0: i32) -> (i32, i32) {
    %c0_i32 = arith.constant 0 : i32
    %c0_i32_0 = arith.constant 0 : i32
    return %arg0, %c0_i32 : i32, i32
  }
  func.func @transform_4(%arg0: i32) -> (i32, i32) {
    %c0_i32 = arith.constant 0 : i32
    %c0_i32_0 = arith.constant 0 : i32
    return %arg0, %c0_i32 : i32, i32
  }
}

</mosaic_0001>

<llo_original>
// kernel: block_forward.4
$region0: #{block_forward.4}
  #allocation0 [shape = 'u32[]', space=smem, size = 0x4, offset = 0x4, fixed_abs, tag = 'smem constant byte address 0x4 - core index']
  #allocation1 [shape = 'u32[144,128]{1,0:T(1,128)}', space=vmem, size = 0x12000, scoped, tag = 'internal scratch']
  %s0 = inlined_call_operand.vmem [shape: bf16[128,128], index: 0, kind: input, shape index: {}]
  %s1 = inlined_call_operand.vmem [shape: bf16[128,128], index: 1, kind: input, shape index: {}]
  %s2 = inlined_call_operand.vmem [shape: bf16[128,128], index: 2, kind: output, shape index: {0}]
  %s3 = inlined_call_operand.vmem [shape: f32[16,128], index: 3, kind: output, shape index: {1}]
  %s4 = inlined_call_operand.vmem [shape: f32[16,128], index: 4, kind: output, shape index: {2}]
  %5 = xla_tuple %s2, %s3, %s4
  %s6 = sld [smem:[#allocation0]]
  $region57: #{block_forward.4} parent=0
    _
  %s8 = ssub.s32 1, %s6
  %s9 = scalar_select 0, %s8, %s6
  loop: start=0, step=1, limit=4
  $region2: #{block_forward.4} parent=0 // loop_pre_header
    _
  $region3: #{block_forward.4} parent=0 // loop_header
    %s11 = sphi 0, %s15
    %p12 = scmp.ge.s32.totalorder %s11, 4
    %s21 = sphi 0, %s23
    %s24 = sphi 0, %s21
    %s25 = sphi 0, %s24
    %s41 = sphi 0, %s25
    %s45 = sphi 0, %s45
    %s47 = sphi 0, %s45
    %s48 = sphi 0, %s47
    %s62 = sphi 0, %s48
    %s68 = sphi 0, %s70
    %s71 = sphi 0, %s68
    %s72 = sphi 0, %s71
    %s88 = sphi 0, %s72
    %s94 = sphi 0, %s96
    %s97 = sphi 0, %s94
    %s98 = sphi 0, %s97
    %s114 = sphi 0, %s98
    %s120 = sphi 0, %s122
    %s123 = sphi 0, %s120
    %s124 = sphi 0, %s123
    %s140 = sphi 0, %s124
  $region4: #{block_forward.4} parent=0 // loop_header_branch
    %14 = sbr.rel (%p12) target = $region8
  $region5: #{block_forward.4} parent=0 // loop_body
    %s16 = ssub.s32 %s11, 1
    %s17 = ssub.s32 %s11, 2
    %s18 = sadd.s32 %s11, 1
    %s19 = ssub.s32 %s11, %s18
    %p20 = scmp.eq.s32.totalorder %s19, 0
    %s22 = sadd.s32 %s21, 1
    %s23 = scalar_select %p20, %s21, %s22
    %p26 = pneg %p20
    %p27 = scmp.eq.s32.totalorder %s11, 1
    %p28 = por %p26, %p27
    %p29 = scmp.ne.s32.totalorder %s21, %s24
    %p30 = scmp.eq.s32.totalorder %s11, 0
    %p31 = por %p29, %p30
    %p32 = scmp.ne.s32.totalorder %s21, %s24
    %p33 = scmp.eq.s32.totalorder %s16, 1
    %p34 = por %p32, %p33
    %p35 = scmp.ne.s32.totalorder %s24, %s25
    %p36 = scmp.eq.s32.totalorder %s16, 0
    %p37 = por %p35, %p36
    %p38 = scmp.ne.s32.totalorder %s24, %s25
    %p39 = scmp.eq.s32.totalorder %s17, 1
    %p40 = por %p38, %p39
    %p42 = scmp.ne.s32.totalorder %s25, %s41
    %p43 = scmp.eq.s32.totalorder %s17, 0
    %p44 = por %p42, %p43
    %s46 = sadd.s32 %s45, 1
    %p49 = scmp.eq.s32.totalorder %s11, 1
    %p50 = scmp.ne.s32.totalorder %s45, %s47
    %p51 = scmp.eq.s32.totalorder %s11, 0
    %p52 = por %p50, %p51
    %p53 = scmp.ne.s32.totalorder %s45, %s47
    %p54 = scmp.eq.s32.totalorder %s16, 1
    %p55 = por %p53, %p54
    %p56 = scmp.ne.s32.totalorder %s47, %s48
    %p57 = scmp.eq.s32.totalorder %s16, 0
    %p58 = por %p56, %p57
    %p59 = scmp.ne.s32.totalorder %s47, %s48
    %p60 = scmp.eq.s32.totalorder %s17, 1
    %p61 = por %p59, %p60
    %p63 = scmp.ne.s32.totalorder %s48, %s62
    %p64 = scmp.eq.s32.totalorder %s17, 0
    %p65 = por %p63, %p64
    %s66 = ssub.s32 %s11, %s18
    %p67 = scmp.eq.s32.totalorder %s66, 0
    %s69 = sadd.s32 %s68, 1
    %s70 = scalar_select %p67, %s68, %s69
    %p73 = pneg %p67
    %p74 = scmp.eq.s32.totalorder %s11, 1
    %p75 = por %p73, %p74
    %p76 = scmp.ne.s32.totalorder %s68, %s71
    %p77 = scmp.eq.s32.totalorder %s11, 0
    %p78 = por %p76, %p77
    %p79 = scmp.ne.s32.totalorder %s68, %s71
    %p80 = scmp.eq.s32.totalorder %s16, 1
    %p81 = por %p79, %p80
    %p82 = scmp.ne.s32.totalorder %s71, %s72
    %p83 = scmp.eq.s32.totalorder %s16, 0
    %p84 = por %p82, %p83
    %p85 = scmp.ne.s32.totalorder %s71, %s72
    %p86 = scmp.eq.s32.totalorder %s17, 1
    %p87 = por %p85, %p86
    %p89 = scmp.ne.s32.totalorder %s72, %s88
    %p90 = scmp.eq.s32.totalorder %s17, 0
    %p91 = por %p89, %p90
    %s92 = ssub.s32 %s11, %s18
    %p93 = scmp.eq.s32.totalorder %s92, 0
    %s95 = sadd.s32 %s94, 1
    %s96 = scalar_select %p93, %s94, %s95
    %p99 = pneg %p93
    %p100 = scmp.eq.s32.totalorder %s11, 1
    %p101 = por %p99, %p100
    %p102 = scmp.ne.s32.totalorder %s94, %s97
    %p103 = scmp.eq.s32.totalorder %s11, 0
    %p104 = por %p102, %p103
    %p105 = scmp.ne.s32.totalorder %s94, %s97
    %p106 = scmp.eq.s32.totalorder %s16, 1
    %p107 = por %p105, %p106
    %p108 = scmp.ne.s32.totalorder %s97, %s98
    %p109 = scmp.eq.s32.totalorder %s16, 0
    %p110 = por %p108, %p109
    %p111 = scmp.ne.s32.totalorder %s97, %s98
    %p112 = scmp.eq.s32.totalorder %s17, 1
    %p113 = por %p111, %p112
    %p115 = scmp.ne.s32.totalorder %s98, %s114
    %p116 = scmp.eq.s32.totalorder %s17, 0
    %p117 = por %p115, %p116
    %s118 = ssub.s32 %s11, %s18
    %p119 = scmp.eq.s32.totalorder %s118, 0
    %s121 = sadd.s32 %s120, 1
    %s122 = scalar_select %p119, %s120, %s121
    %p125 = pneg %p119
    %p126 = scmp.eq.s32.totalorder %s11, 1
    %p127 = por %p125, %p126
    %p128 = scmp.ne.s32.totalorder %s120, %s123
    %p129 = scmp.eq.s32.totalorder %s11, 0
    %p130 = por %p128, %p129
    %p131 = scmp.ne.s32.totalorder %s120, %s123
    %p132 = scmp.eq.s32.totalorder %s16, 1
    %p133 = por %p131, %p132
    %p134 = scmp.ne.s32.totalorder %s123, %s124
    %p135 = scmp.eq.s32.totalorder %s16, 0
    %p136 = por %p134, %p135
    %p137 = scmp.ne.s32.totalorder %s123, %s124
    %p138 = scmp.eq.s32.totalorder %s17, 1
    %p139 = por %p137, %p138
    %p141 = scmp.ne.s32.totalorder %s124, %s140
    %p142 = scmp.eq.s32.totalorder %s17, 0
    %p143 = por %p141, %p142
    %p144 = scmp.le.s32.totalorder 1, %s11
    %p145 = scmp.lt.s32.totalorder %s11, 3
    %p146 = pnand %p144, %p145
    %p147 = pneg %p146
    // Predicated region
    $region9: #{block_forward.4} parent=5 // pred_check
      _
    $region10: #{block_forward.4} parent=5 // pred_check_branch
      %149 = sbr.rel (%p146) target = $region12
    $region11: #{block_forward.4} parent=5 // pred_region
      %s150 = ssub.s32 %s11, 1
      // Predicated region
      $region13: #{block_forward.4} parent=11 // pred_check
        %p151 = pneg %p58
      $region14: #{block_forward.4} parent=11 // pred_check_branch
        %153 = sbr.rel (%p151) target = $region16
      $region15: #{block_forward.4} parent=11 // pred_region
        _
      $region16: #{block_forward.4} parent=11 // pred_fallthru
        _
    $region12: #{block_forward.4} parent=5 // pred_fallthru
      _
    %p154 = scmp.lt.s32.totalorder %s11, 2
    // Predicated region
    $region17: #{block_forward.4} parent=5 // pred_check
      %p155 = pneg %p154
    $region18: #{block_forward.4} parent=5 // pred_check_branch
      %157 = sbr.rel (%p155) target = $region20
    $region19: #{block_forward.4} parent=5 // pred_region
      // Predicated region
      $region21: #{block_forward.4} parent=19 // pred_check
        %p158 = pneg %p31
      $region22: #{block_forward.4} parent=19 // pred_check_branch
        %160 = sbr.rel (%p158) target = $region24
      $region23: #{block_forward.4} parent=19 // pred_region
        %s161 = smul.u32 8, %s11
        %p162 = scmp.lt.s32.totalorder %s161, 15
        %s163 = scalar_select %p162, %s161, 15
        %s164 = smul.addr %s163, 4
        %s165 = scalar_lea.vmem %s0, %s164
        %s166 = smul.u32 8, %s11
      $region24: #{block_forward.4} parent=19 // pred_fallthru
        _
    $region20: #{block_forward.4} parent=5 // pred_fallthru
      _
    %p167 = scmp.le.s32.totalorder 1, %s11
    %p168 = scmp.lt.s32.totalorder %s11, 3
    %p169 = pnand %p167, %p168
    %p170 = pneg %p169
    // Predicated region
    $region25: #{block_forward.4} parent=5 // pred_check
      _
    $region26: #{block_forward.4} parent=5 // pred_check_branch
      %172 = sbr.rel (%p169) target = $region28
    $region27: #{block_forward.4} parent=5 // pred_region
      %s173 = ssub.s32 %s11, 1
      %s174 = smul.u32 8, %s16
      %p175 = scmp.lt.s32.totalorder %s174, 15
      %s176 = scalar_select %p175, %s174, 15
      %s177 = smul.addr %s176, 4
      %s178 = scalar_lea.vmem %s0, %s177
      %p179 = pneg %p37
      %p180 = pneg %p34
      %p181 = pneg %p58
      %p182 = pneg %p55
      %p183 = pneg %p84
      %p184 = pneg %p81
      %s185 = smul.u32 8, %s16
      %p186 = scmp.lt.s32.totalorder %s185, 15
      %s187 = scalar_select %p186, %s185, 15
      %s188 = smul.addr %s187, 4
      %s189 = scalar_lea.vmem %s2, %s188
      %p190 = pneg %p110
      %p191 = pneg %p107
      %p192 = scmp.lt.s32.totalorder %s16, 1
      %s193 = scalar_select %p192, %s16, 1
      %s194 = smul.addr %s193, 8
      %s195 = scalar_lea.vmem %s3, %s194
      %p196 = pneg %p136
      %p197 = pneg %p133
      %p198 = scmp.lt.s32.totalorder %s16, 1
      %s199 = scalar_select %p198, %s16, 1
      %s200 = smul.addr %s199, 8
      %s201 = scalar_lea.vmem %s4, %s200
      %s202 = smul.u32 8, %s16
      %p203 = scmp.lt.s32.totalorder %s202, 15
      %s204 = scalar_select %p203, %s202, 15
      %s205 = smul.addr %s204, 4
      %s206 = scalar_lea.vmem %s0, %s205
      %s207 = smul.u32 8, %s16
      %s208 = smul.u32 8, %s16
      %p209 = scmp.lt.s32.totalorder %s208, 15
      %s210 = scalar_select %p209, %s208, 15
      %s211 = smul.addr %s210, 4
      %s212 = scalar_lea.vmem %s2, %s211
      %s213 = smul.u32 8, %s16
      %p214 = scmp.lt.s32.totalorder %s16, 1
      %s215 = scalar_select %p214, %s16, 1
      %s216 = smul.addr %s215, 8
      %s217 = scalar_lea.vmem %s3, %s216
      %p218 = scmp.lt.s32.totalorder %s16, 1
      %s219 = scalar_select %p218, %s16, 1
      %s220 = smul.addr %s219, 8
      %s221 = scalar_lea.vmem %s4, %s220
      %v223 = vld [vmem:[%s206] sm:$0xf]
      %v224 = vld [vmem:[%s206 + $0x4] sm:$0xf]
      %v225 = vld [vmem:[%s206 + $0x8] sm:$0xf]
      %v226 = vld [vmem:[%s206 + $0xc] sm:$0xf]
      %v227 = vld [vmem:[%s206 + $0x10] sm:$0xf]
      %v228 = vld [vmem:[%s206 + $0x14] sm:$0xf]
      %v229 = vld [vmem:[%s206 + $0x18] sm:$0xf]
      %v230 = vld [vmem:[%s206 + $0x1c] sm:$0xf]
      %v231 = vld [vmem:[%s1] sm:$0xf]
      %v232 = vld [vmem:[%s1 + $0x4] sm:$0xf]
      %v233 = vld [vmem:[%s1 + $0x8] sm:$0xf]
      %v234 = vld [vmem:[%s1 + $0xc] sm:$0xf]
      %v235 = vld [vmem:[%s1 + $0x10] sm:$0xf]
      %v236 = vld [vmem:[%s1 + $0x14] sm:$0xf]
      %v237 = vld [vmem:[%s1 + $0x18] sm:$0xf]
      %v238 = vld [vmem:[%s1 + $0x1c] sm:$0xf]
      %v239 = vld [vmem:[%s1 + $0x20] sm:$0xf]
      %v240 = vld [vmem:[%s1 + $0x24] sm:$0xf]
      %v241 = vld [vmem:[%s1 + $0x28] sm:$0xf]
      %v242 = vld [vmem:[%s1 + $0x2c] sm:$0xf]
      %v243 = vld [vmem:[%s1 + $0x30] sm:$0xf]
      %v244 = vld [vmem:[%s1 + $0x34] sm:$0xf]
      %v245 = vld [vmem:[%s1 + $0x38] sm:$0xf]
      %v246 = vld [vmem:[%s1 + $0x3c] sm:$0xf]
      %v255 = vunpack.c.l.b16 %v223
      %v256 = vunpack.c.l.b16 %v224
      %v257 = vunpack.c.l.b16 %v225
      %v258 = vunpack.c.l.b16 %v226
      %v259 = vunpack.c.l.b16 %v227
      %v260 = vunpack.c.l.b16 %v228
      %v261 = vunpack.c.l.b16 %v229
      %v262 = vunpack.c.l.b16 %v230
      %v263 = vpack.c.b16 %v256, %v255
      %v264 = vpack.c.b16 %v258, %v257
      %v265 = vpack.c.b16 %v260, %v259
      %v266 = vpack.c.b16 %v262, %v261
      %v287 = vunpack.c.l.b16 %v231
      %v288 = vunpack.c.l.b16 %v232
      %v289 = vunpack.c.l.b16 %v233
      %v290 = vunpack.c.l.b16 %v234
      %v291 = vunpack.c.l.b16 %v235
      %v292 = vunpack.c.l.b16 %v236
      %v293 = vunpack.c.l.b16 %v237
      %v294 = vunpack.c.l.b16 %v238
      %v295 = vunpack.c.l.b16 %v239
      %v296 = vunpack.c.l.b16 %v240
      %v297 = vunpack.c.l.b16 %v241
      %v298 = vunpack.c.l.b16 %v242
      %v299 = vunpack.c.l.b16 %v243
      %v300 = vunpack.c.l.b16 %v244
      %v301 = vunpack.c.l.b16 %v245
      %v302 = vunpack.c.l.b16 %v246
      %v303 = vpack.c.b16 %v288, %v287
      %v304 = vpack.c.b16 %v290, %v289
      %v305 = vpack.c.b16 %v292, %v291
      %v306 = vpack.c.b16 %v294, %v293
      %v307 = vpack.c.b16 %v296, %v295
      %v308 = vpack.c.b16 %v298, %v297
      %v309 = vpack.c.b16 %v300, %v299
      %v310 = vpack.c.b16 %v302, %v301
      %319 = vmatprep.subr.bf16.mxu0 0
      %320 = vmatpush1.bf16.msra.mxu0 %v310
      %321 = vmatprep.subr.bf16.mxu0 0
      %322 = vmatpush1.bf16.msra.mxu0 %v309
      %323 = vmatprep.subr.bf16.mxu0 0
      %324 = vmatpush1.bf16.msra.mxu0 %v308
      %325 = vmatprep.subr.bf16.mxu0 0
      %326 = vmatpush1.bf16.msra.mxu0 %v307
      %327 = vmatprep.subr.bf16.mxu0 0
      %328 = vmatpush1.bf16.msra.mxu0 %v306
      %329 = vmatprep.subr.bf16.mxu0 0
      %330 = vmatpush1.bf16.msra.mxu0 %v305
      %331 = vmatprep.subr.bf16.mxu0 0
      %332 = vmatpush1.bf16.msra.mxu0 %v304
      %333 = vmatprep.subr.bf16.mxu0 0
      %334 = vmatpush1.bf16.msra.mxu0 %v303
      %335 = vmatprep.subr.bf16.mxu0 0
      %336 = vmatpush2.bf16.msra.mxu0 0
      %337 = vmatprep.subr.bf16.mxu0 0
      %338 = vmatpush2.bf16.msra.mxu0 0
      %339 = vmatprep.subr.bf16.mxu0 0
      %340 = vmatpush2.bf16.msra.mxu0 0
      %341 = vmatprep.subr.bf16.mxu0 0
      %342 = vmatpush2.bf16.msra.mxu0 0
      %343 = vmatprep.subr.bf16.mxu0 0
      %344 = vmatpush2.bf16.msra.mxu0 0
      %345 = vmatprep.subr.bf16.mxu0 0
      %346 = vmatpush2.bf16.msra.mxu0 0
      %347 = vmatprep.subr.bf16.mxu0 0
      %348 = vmatpush2.bf16.msra.mxu0 0
      %349 = vmatprep.subr.bf16.mxu0 0
      %350 = vmatpush2.bf16.msra.mxu0 0
      %351 = vmatprep.mubr.bf16.mxu0 0
      %352 = vmatmul.mubr.bf16.gmra.mxu0 %v263
      %v353 = vpop.f32.mrf.mxu0
      %v354 = vadd.f32 0.0, %v353
      %v355 = vpop.f32.mrf.mxu0
      %v356 = vpop.f32.mrf.mxu0
      %v357 = vadd.f32 0.0, %v356
      %v358 = vpop.f32.mrf.mxu0
      %359 = vmatprep.mubr.bf16.mxu0 0
      %360 = vmatmul.mubr.bf16.gmra.mxu0 %v264
      %v361 = vpop.f32.mrf.mxu0
      %v362 = vadd.f32 0.0, %v361
      %v363 = vpop.f32.mrf.mxu0
      %v364 = vpop.f32.mrf.mxu0
      %v365 = vadd.f32 0.0, %v364
      %v366 = vpop.f32.mrf.mxu0
      %367 = vmatprep.mubr.bf16.mxu0 0
      %368 = vmatmul.mubr.bf16.gmra.mxu0 %v265
      %v369 = vpop.f32.mrf.mxu0
      %v370 = vadd.f32 0.0, %v369
      %v371 = vpop.f32.mrf.mxu0
      %v372 = vpop.f32.mrf.mxu0
      %v373 = vadd.f32 0.0, %v372
      %v374 = vpop.f32.mrf.mxu0
      %375 = vmatprep.mubr.bf16.mxu0 0
      %376 = vmatmul.mubr.bf16.gmra.mxu0 %v266
      %v377 = vpop.f32.mrf.mxu0
      %v378 = vadd.f32 0.0, %v377
      %v379 = vpop.f32.mrf.mxu0
      %v380 = vpop.f32.mrf.mxu0
      %v381 = vadd.f32 0.0, %v380
      %v382 = vpop.f32.mrf.mxu0
      %383 = vdwg.mxu0
      %v384 = vpack.c.bf16 %v357, %v354
      %v385 = vpack.c.bf16 %v365, %v362
      %v386 = vpack.c.bf16 %v373, %v370
      %v387 = vpack.c.bf16 %v381, %v378
      %v392 = vunpack.c.l.b16 %v384
      %v393 = vunpack.c.h.b16 %v384
      %v394 = vunpack.c.l.b16 %v385
      %v395 = vunpack.c.h.b16 %v385
      %v396 = vunpack.c.l.b16 %v386
      %v397 = vunpack.c.h.b16 %v386
      %v398 = vunpack.c.l.b16 %v387
      %v399 = vunpack.c.h.b16 %v387
      %v400 = vpack.c.b16 %v392, %v392
      %v401 = vpack.c.b16 %v393, %v393
      %v402 = vpack.c.b16 %v394, %v394
      %v403 = vpack.c.b16 %v395, %v395
      %v404 = vpack.c.b16 %v396, %v396
      %v405 = vpack.c.b16 %v397, %v397
      %v406 = vpack.c.b16 %v398, %v398
      %v407 = vpack.c.b16 %v399, %v399
      %416 = vst [vmem:[%s212] sm:$0xf] %v400
      %417 = vst [vmem:[%s212 + $0x4] sm:$0xf] %v401
      %418 = vst [vmem:[%s212 + $0x8] sm:$0xf] %v402
      %419 = vst [vmem:[%s212 + $0xc] sm:$0xf] %v403
      %420 = vst [vmem:[%s212 + $0x10] sm:$0xf] %v404
      %421 = vst [vmem:[%s212 + $0x14] sm:$0xf] %v405
      %422 = vst [vmem:[%s212 + $0x18] sm:$0xf] %v406
      %423 = vst [vmem:[%s212 + $0x1c] sm:$0xf] %v407
      %v424 = vadd.f32 %v354, %v357
      %v425 = vadd.f32 %v424, %v362
      %v426 = vadd.f32 %v425, %v365
      %v427 = vadd.f32 %v426, %v370
      %v428 = vadd.f32 %v427, %v373
      %v429 = vadd.f32 %v428, %v378
      %v430 = vadd.f32 %v429, %v381
      %431 = vst [vmem:[%s217] sm:$0xff] %v430
      %v432 = vmul.f32 %v354, %v354
      %v433 = vmul.f32 %v357, %v357
      %v434 = vmul.f32 %v362, %v362
      %v435 = vmul.f32 %v365, %v365
      %v436 = vmul.f32 %v370, %v370
      %v437 = vmul.f32 %v373, %v373
      %v438 = vmul.f32 %v378, %v378
      %v439 = vmul.f32 %v381, %v381
      %v440 = vadd.f32 %v432, %v433
      %v441 = vadd.f32 %v440, %v434
      %v442 = vadd.f32 %v441, %v435
      %v443 = vadd.f32 %v442, %v436
      %v444 = vadd.f32 %v443, %v437
      %v445 = vadd.f32 %v444, %v438
      %v446 = vadd.f32 %v445, %v439
      %447 = vst [vmem:[%s221] sm:$0xff] %v446
      %s448 = smul.u32 8, %s16
      %p449 = scmp.lt.s32.totalorder %s448, 15
      %s450 = scalar_select %p449, %s448, 15
      %s451 = smul.addr %s450, 4
      %s452 = scalar_lea.vmem %s2, %s451
      %p453 = scmp.lt.s32.totalorder %s16, 1
      %s454 = scalar_select %p453, %s16, 1
      %s455 = smul.addr %s454, 8
      %s456 = scalar_lea.vmem %s3, %s455
      %p457 = scmp.lt.s32.totalorder %s16, 1
      %s458 = scalar_select %p457, %s16, 1
      %s459 = smul.addr %s458, 8
      %s460 = scalar_lea.vmem %s4, %s459
      // Predicated region
      $region29: #{block_forward.4} parent=27 // pred_check
        %p461 = pneg %p81
      $region30: #{block_forward.4} parent=27 // pred_check_branch
        %463 = sbr.rel (%p461) target = $region32
      $region31: #{block_forward.4} parent=27 // pred_region
        %s464 = smul.u32 8, %s16
      $region32: #{block_forward.4} parent=27 // pred_fallthru
        _
      // Predicated region
      $region33: #{block_forward.4} parent=27 // pred_check
        %p465 = pneg %p107
      $region34: #{block_forward.4} parent=27 // pred_check_branch
        %467 = sbr.rel (%p465) target = $region36
      $region35: #{block_forward.4} parent=27 // pred_region
        _
      $region36: #{block_forward.4} parent=27 // pred_fallthru
        _
      // Predicated region
      $region37: #{block_forward.4} parent=27 // pred_check
        %p468 = pneg %p133
      $region38: #{block_forward.4} parent=27 // pred_check_branch
        %470 = sbr.rel (%p468) target = $region40
      $region39: #{block_forward.4} parent=27 // pred_region
        _
      $region40: #{block_forward.4} parent=27 // pred_fallthru
        _
    $region28: #{block_forward.4} parent=5 // pred_fallthru
      _
    %p471 = scmp.le.s32.totalorder 2, %s11
    // Predicated region
    $region41: #{block_forward.4} parent=5 // pred_check
      %p472 = pneg %p471
    $region42: #{block_forward.4} parent=5 // pred_check_branch
      %474 = sbr.rel (%p472) target = $region44
    $region43: #{block_forward.4} parent=5 // pred_region
      %s475 = ssub.s32 %s11, 2
      // Predicated region
      $region45: #{block_forward.4} parent=43 // pred_check
        %p476 = pneg %p87
      $region46: #{block_forward.4} parent=43 // pred_check_branch
        %478 = sbr.rel (%p476) target = $region48
      $region47: #{block_forward.4} parent=43 // pred_region
        %s479 = smul.u32 8, %s17
        %p480 = scmp.lt.s32.totalorder %s479, 15
        %s481 = scalar_select %p480, %s479, 15
        %s482 = smul.addr %s481, 4
        %s483 = scalar_lea.vmem %s2, %s482
      $region48: #{block_forward.4} parent=43 // pred_fallthru
        _
      // Predicated region
      $region49: #{block_forward.4} parent=43 // pred_check
        %p484 = pneg %p113
      $region50: #{block_forward.4} parent=43 // pred_check_branch
        %486 = sbr.rel (%p484) target = $region52
      $region51: #{block_forward.4} parent=43 // pred_region
        %p487 = scmp.lt.s32.totalorder %s17, 1
        %s488 = scalar_select %p487, %s17, 1
        %s489 = smul.addr %s488, 8
        %s490 = scalar_lea.vmem %s3, %s489
      $region52: #{block_forward.4} parent=43 // pred_fallthru
        _
      // Predicated region
      $region53: #{block_forward.4} parent=43 // pred_check
        %p491 = pneg %p139
      $region54: #{block_forward.4} parent=43 // pred_check_branch
        %493 = sbr.rel (%p491) target = $region56
      $region55: #{block_forward.4} parent=43 // pred_region
        %p494 = scmp.lt.s32.totalorder %s17, 1
        %s495 = scalar_select %p494, %s17, 1
        %s496 = smul.addr %s495, 8
        %s497 = scalar_lea.vmem %s4, %s496
      $region56: #{block_forward.4} parent=43 // pred_fallthru
        _
    $region44: #{block_forward.4} parent=5 // pred_fallthru
      _
  $region6: #{block_forward.4} parent=0 // loop_footer
    %s15 = sadd.s32 1, %s11
  $region7: #{block_forward.4} parent=0 // loop_footer_branch
    %10 = sbr.rel target = $region3
  $region8: #{block_forward.4} parent=0 // loop_exit
    _

// kernel: block_forward.5
$region0: #{block_forward.5}
  #allocation0 [shape = 'u32[]', space=smem, size = 0x4, offset = 0x4, fixed_abs, tag = 'smem constant byte address 0x4 - core index']
  #allocation1 [shape = 'u32[144,128]{1,0:T(1,128)}', space=vmem, size = 0x12000, scoped, tag = 'internal scratch']
  %s0 = inlined_call_operand.vmem [shape: bf16[128,128], index: 0, kind: input, shape index: {}, may-alias: {0,3}]
  %s1 = inlined_call_operand.vmem [shape: f32[1,128], index: 1, kind: input, shape index: {}]
  %s2 = inlined_call_operand.vmem [shape: f32[1,128], index: 2, kind: input, shape index: {}]
  %s3 = inlined_call_operand.vmem [shape: bf16[128,128], index: 3, kind: output, shape index: {}, may-alias: {0,3}]
  %s4 = sld [smem:[#allocation0]]
  $region45: #{block_forward.5} parent=0
    _
  %s6 = ssub.s32 1, %s4
  %s7 = scalar_select 0, %s6, %s4
  loop: start=0, step=1, limit=4
  $region2: #{block_forward.5} parent=0 // loop_pre_header
    _
  $region3: #{block_forward.5} parent=0 // loop_header
    %s9 = sphi 0, %s13
    %p10 = scmp.ge.s32.totalorder %s9, 4
    %s19 = sphi 0, %s21
    %s22 = sphi 0, %s19
    %s23 = sphi 0, %s22
    %s39 = sphi 0, %s23
    %s43 = sphi 0, %s43
    %s45 = sphi 0, %s43
    %s46 = sphi 0, %s45
    %s60 = sphi 0, %s46
    %s64 = sphi 0, %s64
    %s66 = sphi 0, %s64
    %s67 = sphi 0, %s66
    %s81 = sphi 0, %s67
    %s87 = sphi 0, %s89
    %s90 = sphi 0, %s87
    %s91 = sphi 0, %s90
    %s107 = sphi 0, %s91
  $region4: #{block_forward.5} parent=0 // loop_header_branch
    %12 = sbr.rel (%p10) target = $region8
  $region5: #{block_forward.5} parent=0 // loop_body
    %s14 = ssub.s32 %s9, 1
    %s15 = ssub.s32 %s9, 2
    %s16 = sadd.s32 %s9, 1
    %s17 = ssub.s32 %s9, %s16
    %p18 = scmp.eq.s32.totalorder %s17, 0
    %s20 = sadd.s32 %s19, 1
    %s21 = scalar_select %p18, %s19, %s20
    %p24 = pneg %p18
    %p25 = scmp.eq.s32.totalorder %s9, 1
    %p26 = por %p24, %p25
    %p27 = scmp.ne.s32.totalorder %s19, %s22
    %p28 = scmp.eq.s32.totalorder %s9, 0
    %p29 = por %p27, %p28
    %p30 = scmp.ne.s32.totalorder %s19, %s22
    %p31 = scmp.eq.s32.totalorder %s14, 1
    %p32 = por %p30, %p31
    %p33 = scmp.ne.s32.totalorder %s22, %s23
    %p34 = scmp.eq.s32.totalorder %s14, 0
    %p35 = por %p33, %p34
    %p36 = scmp.ne.s32.totalorder %s22, %s23
    %p37 = scmp.eq.s32.totalorder %s15, 1
    %p38 = por %p36, %p37
    %p40 = scmp.ne.s32.totalorder %s23, %s39
    %p41 = scmp.eq.s32.totalorder %s15, 0
    %p42 = por %p40, %p41
    %s44 = sadd.s32 %s43, 1
    %p47 = scmp.eq.s32.totalorder %s9, 1
    %p48 = scmp.ne.s32.totalorder %s43, %s45
    %p49 = scmp.eq.s32.totalorder %s9, 0
    %p50 = por %p48, %p49
    %p51 = scmp.ne.s32.totalorder %s43, %s45
    %p52 = scmp.eq.s32.totalorder %s14, 1
    %p53 = por %p51, %p52
    %p54 = scmp.ne.s32.totalorder %s45, %s46
    %p55 = scmp.eq.s32.totalorder %s14, 0
    %p56 = por %p54, %p55
    %p57 = scmp.ne.s32.totalorder %s45, %s46
    %p58 = scmp.eq.s32.totalorder %s15, 1
    %p59 = por %p57, %p58
    %p61 = scmp.ne.s32.totalorder %s46, %s60
    %p62 = scmp.eq.s32.totalorder %s15, 0
    %p63 = por %p61, %p62
    %s65 = sadd.s32 %s64, 1
    %p68 = scmp.eq.s32.totalorder %s9, 1
    %p69 = scmp.ne.s32.totalorder %s64, %s66
    %p70 = scmp.eq.s32.totalorder %s9, 0
    %p71 = por %p69, %p70
    %p72 = scmp.ne.s32.totalorder %s64, %s66
    %p73 = scmp.eq.s32.totalorder %s14, 1
    %p74 = por %p72, %p73
    %p75 = scmp.ne.s32.totalorder %s66, %s67
    %p76 = scmp.eq.s32.totalorder %s14, 0
    %p77 = por %p75, %p76
    %p78 = scmp.ne.s32.totalorder %s66, %s67
    %p79 = scmp.eq.s32.totalorder %s15, 1
    %p80 = por %p78, %p79
    %p82 = scmp.ne.s32.totalorder %s67, %s81
    %p83 = scmp.eq.s32.totalorder %s15, 0
    %p84 = por %p82, %p83
    %s85 = ssub.s32 %s9, %s16
    %p86 = scmp.eq.s32.totalorder %s85, 0
    %s88 = sadd.s32 %s87, 1
    %s89 = scalar_select %p86, %s87, %s88
    %p92 = pneg %p86
    %p93 = scmp.eq.s32.totalorder %s9, 1
    %p94 = por %p92, %p93
    %p95 = scmp.ne.s32.totalorder %s87, %s90
    %p96 = scmp.eq.s32.totalorder %s9, 0
    %p97 = por %p95, %p96
    %p98 = scmp.ne.s32.totalorder %s87, %s90
    %p99 = scmp.eq.s32.totalorder %s14, 1
    %p100 = por %p98, %p99
    %p101 = scmp.ne.s32.totalorder %s90, %s91
    %p102 = scmp.eq.s32.totalorder %s14, 0
    %p103 = por %p101, %p102
    %p104 = scmp.ne.s32.totalorder %s90, %s91
    %p105 = scmp.eq.s32.totalorder %s15, 1
    %p106 = por %p104, %p105
    %p108 = scmp.ne.s32.totalorder %s91, %s107
    %p109 = scmp.eq.s32.totalorder %s15, 0
    %p110 = por %p108, %p109
    %p111 = scmp.le.s32.totalorder 1, %s9
    %p112 = scmp.lt.s32.totalorder %s9, 3
    %p113 = pnand %p111, %p112
    %p114 = pneg %p113
    // Predicated region
    $region9: #{block_forward.5} parent=5 // pred_check
      _
    $region10: #{block_forward.5} parent=5 // pred_check_branch
      %116 = sbr.rel (%p113) target = $region12
    $region11: #{block_forward.5} parent=5 // pred_region
      %s117 = ssub.s32 %s9, 1
      // Predicated region
      $region13: #{block_forward.5} parent=11 // pred_check
        %p118 = pneg %p56
      $region14: #{block_forward.5} parent=11 // pred_check_branch
        %120 = sbr.rel (%p118) target = $region16
      $region15: #{block_forward.5} parent=11 // pred_region
        _
      $region16: #{block_forward.5} parent=11 // pred_fallthru
        _
      // Predicated region
      $region17: #{block_forward.5} parent=11 // pred_check
        %p121 = pneg %p77
      $region18: #{block_forward.5} parent=11 // pred_check_branch
        %123 = sbr.rel (%p121) target = $region20
      $region19: #{block_forward.5} parent=11 // pred_region
        _
      $region20: #{block_forward.5} parent=11 // pred_fallthru
        _
    $region12: #{block_forward.5} parent=5 // pred_fallthru
      _
    %p124 = scmp.lt.s32.totalorder %s9, 2
    // Predicated region
    $region21: #{block_forward.5} parent=5 // pred_check
      %p125 = pneg %p124
    $region22: #{block_forward.5} parent=5 // pred_check_branch
      %127 = sbr.rel (%p125) target = $region24
    $region23: #{block_forward.5} parent=5 // pred_region
      // Predicated region
      $region25: #{block_forward.5} parent=23 // pred_check
        %p128 = pneg %p29
      $region26: #{block_forward.5} parent=23 // pred_check_branch
        %130 = sbr.rel (%p128) target = $region28
      $region27: #{block_forward.5} parent=23 // pred_region
        %s131 = smul.u32 8, %s9
        %p132 = scmp.lt.s32.totalorder %s131, 15
        %s133 = scalar_select %p132, %s131, 15
        %s134 = smul.addr %s133, 4
        %s135 = scalar_lea.vmem %s0, %s134
        %s136 = smul.u32 8, %s9
      $region28: #{block_forward.5} parent=23 // pred_fallthru
        _
    $region24: #{block_forward.5} parent=5 // pred_fallthru
      _
    %p137 = scmp.le.s32.totalorder 1, %s9
    %p138 = scmp.lt.s32.totalorder %s9, 3
    %p139 = pnand %p137, %p138
    %p140 = pneg %p139
    // Predicated region
    $region29: #{block_forward.5} parent=5 // pred_check
      _
    $region30: #{block_forward.5} parent=5 // pred_check_branch
      %142 = sbr.rel (%p139) target = $region32
    $region31: #{block_forward.5} parent=5 // pred_region
      %s143 = ssub.s32 %s9, 1
      %s144 = smul.u32 8, %s14
      %p145 = scmp.lt.s32.totalorder %s144, 15
      %s146 = scalar_select %p145, %s144, 15
      %s147 = smul.addr %s146, 4
      %s148 = scalar_lea.vmem %s0, %s147
      %p149 = pneg %p35
      %p150 = pneg %p32
      %p151 = pneg %p56
      %p152 = pneg %p53
      %p153 = pneg %p77
      %p154 = pneg %p74
      %p155 = pneg %p103
      %p156 = pneg %p100
      %s157 = smul.u32 8, %s14
      %p158 = scmp.lt.s32.totalorder %s157, 15
      %s159 = scalar_select %p158, %s157, 15
      %s160 = smul.addr %s159, 4
      %s161 = scalar_lea.vmem %s3, %s160
      %s162 = smul.u32 8, %s14
      %p163 = scmp.lt.s32.totalorder %s162, 15
      %s164 = scalar_select %p163, %s162, 15
      %s165 = smul.addr %s164, 4
      %s166 = scalar_lea.vmem %s0, %s165
      %s167 = smul.u32 8, %s14
      %s168 = smul.u32 8, %s14
      %p169 = scmp.lt.s32.totalorder %s168, 15
      %s170 = scalar_select %p169, %s168, 15
      %s171 = smul.addr %s170, 4
      %s172 = scalar_lea.vmem %s3, %s171
      %s173 = smul.u32 8, %s14
      %v174 = vld [vmem:[%s166] sm:$0xf]
      %v175 = vld [vmem:[%s166 + $0x4] sm:$0xf]
      %v176 = vld [vmem:[%s166 + $0x8] sm:$0xf]
      %v177 = vld [vmem:[%s166 + $0xc] sm:$0xf]
      %v178 = vld [vmem:[%s166 + $0x10] sm:$0xf]
      %v179 = vld [vmem:[%s166 + $0x14] sm:$0xf]
      %v180 = vld [vmem:[%s166 + $0x18] sm:$0xf]
      %v181 = vld [vmem:[%s166 + $0x1c] sm:$0xf]
      %v182 = vunpack.c.l.bf16 %v174
      %v183 = vunpack.c.l.bf16 %v175
      %v184 = vunpack.c.l.bf16 %v176
      %v185 = vunpack.c.l.bf16 %v177
      %v186 = vunpack.c.l.bf16 %v178
      %v187 = vunpack.c.l.bf16 %v179
      %v188 = vunpack.c.l.bf16 %v180
      %v189 = vunpack.c.l.bf16 %v181
      %v190 = vld [vmem:[%s1] sm:$0x1]
      %v192 = vlaneseq
      %v193 = vshrl.u32 %v192, 7
      %v194 = vsub.s32 0, %v193
      %v195 = vrot.slane %v190, %v194
      %v197 = vmul.f32 %v182, %v195
      %v198 = vmul.f32 %v183, %v195
      %v199 = vmul.f32 %v184, %v195
      %v200 = vmul.f32 %v185, %v195
      %v201 = vmul.f32 %v186, %v195
      %v202 = vmul.f32 %v187, %v195
      %v203 = vmul.f32 %v188, %v195
      %v204 = vmul.f32 %v189, %v195
      %v205 = vld [vmem:[%s2] sm:$0x1]
      %v207 = vlaneseq
      %v208 = vshrl.u32 %v207, 7
      %v209 = vsub.s32 0, %v208
      %v210 = vrot.slane %v205, %v209
      %v212 = vadd.f32 %v197, %v210
      %v213 = vadd.f32 %v198, %v210
      %v214 = vadd.f32 %v199, %v210
      %v215 = vadd.f32 %v200, %v210
      %v216 = vadd.f32 %v201, %v210
      %v217 = vadd.f32 %v202, %v210
      %v218 = vadd.f32 %v203, %v210
      %v219 = vadd.f32 %v204, %v210
      %v220 = vlaneseq
      %v221 = vand.u32 %v220, 127
      %vm222 = vcmp.lt.s32.totalorder %v221, 8
      %v223 = vmax.f32 %v212, 0.0
      %v224 = vmax.f32 %v213, 0.0
      %v225 = vmax.f32 %v214, 0.0
      %v226 = vmax.f32 %v215, 0.0
      %v227 = vmax.f32 %v216, 0.0
      %v228 = vmax.f32 %v217, 0.0
      %v229 = vmax.f32 %v218, 0.0
      %v230 = vmax.f32 %v219, 0.0
      %v231 = vsel %vm222, %v223, %v212
      %v232 = vsel %vm222, %v224, %v213
      %v233 = vsel %vm222, %v225, %v214
      %v234 = vsel %vm222, %v226, %v215
      %v235 = vsel %vm222, %v227, %v216
      %v236 = vsel %vm222, %v228, %v217
      %v237 = vsel %vm222, %v229, %v218
      %v238 = vsel %vm222, %v230, %v219
      %v239 = vpack.c.bf16 %v232, %v231
      %v240 = vpack.c.bf16 %v234, %v233
      %v241 = vpack.c.bf16 %v236, %v235
      %v242 = vpack.c.bf16 %v238, %v237
      %v247 = vunpack.c.l.b16 %v239
      %v248 = vunpack.c.h.b16 %v239
      %v249 = vunpack.c.l.b16 %v240
      %v250 = vunpack.c.h.b16 %v240
      %v251 = vunpack.c.l.b16 %v241
      %v252 = vunpack.c.h.b16 %v241
      %v253 = vunpack.c.l.b16 %v242
      %v254 = vunpack.c.h.b16 %v242
      %v255 = vpack.c.b16 %v247, %v247
      %v256 = vpack.c.b16 %v248, %v248
      %v257 = vpack.c.b16 %v249, %v249
      %v258 = vpack.c.b16 %v250, %v250
      %v259 = vpack.c.b16 %v251, %v251
      %v260 = vpack.c.b16 %v252, %v252
      %v261 = vpack.c.b16 %v253, %v253
      %v262 = vpack.c.b16 %v254, %v254
      %271 = vst [vmem:[%s172] sm:$0xf] %v255
      %272 = vst [vmem:[%s172 + $0x4] sm:$0xf] %v256
      %273 = vst [vmem:[%s172 + $0x8] sm:$0xf] %v257
      %274 = vst [vmem:[%s172 + $0xc] sm:$0xf] %v258
      %275 = vst [vmem:[%s172 + $0x10] sm:$0xf] %v259
      %276 = vst [vmem:[%s172 + $0x14] sm:$0xf] %v260
      %277 = vst [vmem:[%s172 + $0x18] sm:$0xf] %v261
      %278 = vst [vmem:[%s172 + $0x1c] sm:$0xf] %v262
      %s279 = smul.u32 8, %s14
      %p280 = scmp.lt.s32.totalorder %s279, 15
      %s281 = scalar_select %p280, %s279, 15
      %s282 = smul.addr %s281, 4
      %s283 = scalar_lea.vmem %s3, %s282
      // Predicated region
      $region33: #{block_forward.5} parent=31 // pred_check
        %p284 = pneg %p100
      $region34: #{block_forward.5} parent=31 // pred_check_branch
        %286 = sbr.rel (%p284) target = $region36
      $region35: #{block_forward.5} parent=31 // pred_region
        %s287 = smul.u32 8, %s14
      $region36: #{block_forward.5} parent=31 // pred_fallthru
        _
    $region32: #{block_forward.5} parent=5 // pred_fallthru
      _
    %p288 = scmp.le.s32.totalorder 2, %s9
    // Predicated region
    $region37: #{block_forward.5} parent=5 // pred_check
      %p289 = pneg %p288
    $region38: #{block_forward.5} parent=5 // pred_check_branch
      %291 = sbr.rel (%p289) target = $region40
    $region39: #{block_forward.5} parent=5 // pred_region
      %s292 = ssub.s32 %s9, 2
      // Predicated region
      $region41: #{block_forward.5} parent=39 // pred_check
        %p293 = pneg %p106
      $region42: #{block_forward.5} parent=39 // pred_check_branch
        %295 = sbr.rel (%p293) target = $region44
      $region43: #{block_forward.5} parent=39 // pred_region
        %s296 = smul.u32 8, %s15
        %p297 = scmp.lt.s32.totalorder %s296, 15
        %s298 = scalar_select %p297, %s296, 15
        %s299 = smul.addr %s298, 4
        %s300 = scalar_lea.vmem %s3, %s299
      $region44: #{block_forward.5} parent=39 // pred_fallthru
        _
    $region40: #{block_forward.5} parent=5 // pred_fallthru
      _
  $region6: #{block_forward.5} parent=0 // loop_footer
    %s13 = sadd.s32 1, %s9
  $region7: #{block_forward.5} parent=0 // loop_footer_branch
    %8 = sbr.rel target = $region3
  $region8: #{block_forward.5} parent=0 // loop_exit
    _

// kernel: block_forward.7
$region0: #{block_forward.7}
  #allocation0 [shape = 'u32[]', space=smem, size = 0x4, offset = 0x4, fixed_abs, tag = 'smem constant byte address 0x4 - core index']
  #allocation1 [shape = 'u32[144,128]{1,0:T(1,128)}', space=vmem, size = 0x12000, scoped, tag = 'internal scratch']
  %s0 = inlined_call_operand.vmem [shape: bf16[128,128], index: 0, kind: input, shape index: {}]
  %s1 = inlined_call_operand.vmem [shape: f32[1,128], index: 1, kind: input, shape index: {}]
  %s2 = inlined_call_operand.vmem [shape: f32[1,128], index: 2, kind: input, shape index: {}]
  %s3 = inlined_call_operand.vmem [shape: bf16[128,128], index: 3, kind: input, shape index: {}]
  %s4 = inlined_call_operand.hbm [shape: f32[128,128], index: 4, kind: output, shape index: {}]
  %s5 = sld [smem:[#allocation0]]
  $region49: #{block_forward.7} parent=0
    _
  %s7 = ssub.s32 1, %s5
  %s8 = scalar_select 0, %s7, %s5
  $region1: #{block_forward.7} parent=0
    #allocation2 [shape = 'u8[65536]{0}', space=vmem, size = 0x10000, scoped, tag = 'output window, operand 0']
    #allocation3 [shape = 's32[2]{0}', space=sflag, size = 0x8, scoped, tag = 'scoped memory for block_forward.7']
    %9 = vsyncpa [#allocation3], 0
    %s10 = scalar_lea.sflag [#allocation3], 1
    %11 = vsyncpa %s10, 0
    loop: start=0, step=1, limit=4
    $region2: #{block_forward.7} parent=1 // loop_pre_header
      _
    $region3: #{block_forward.7} parent=1 // loop_header
      %s13 = sphi 0, %s17
      %p14 = scmp.ge.s32.totalorder %s13, 4
      %s23 = sphi 0, %s25
      %s26 = sphi 0, %s23
      %s27 = sphi 0, %s26
      %s43 = sphi 0, %s27
      %s47 = sphi 0, %s47
      %s49 = sphi 0, %s47
      %s50 = sphi 0, %s49
      %s64 = sphi 0, %s50
      %s68 = sphi 0, %s68
      %s70 = sphi 0, %s68
      %s71 = sphi 0, %s70
      %s85 = sphi 0, %s71
      %s91 = sphi 0, %s93
      %s94 = sphi 0, %s91
      %s95 = sphi 0, %s94
      %s111 = sphi 0, %s95
      %s117 = sphi 0, %s119
      %s120 = sphi 0, %s117
      %s121 = sphi 0, %s120
      %s137 = sphi 0, %s121
    $region4: #{block_forward.7} parent=1 // loop_header_branch
      %16 = sbr.rel (%p14) target = $region8
    $region5: #{block_forward.7} parent=1 // loop_body
      %s18 = ssub.s32 %s13, 1
      %s19 = ssub.s32 %s13, 2
      %s20 = sadd.s32 %s13, 1
      %s21 = ssub.s32 %s13, %s20
      %p22 = scmp.eq.s32.totalorder %s21, 0
      %s24 = sadd.s32 %s23, 1
      %s25 = scalar_select %p22, %s23, %s24
      %p28 = pneg %p22
      %p29 = scmp.eq.s32.totalorder %s13, 1
      %p30 = por %p28, %p29
      %p31 = scmp.ne.s32.totalorder %s23, %s26
      %p32 = scmp.eq.s32.totalorder %s13, 0
      %p33 = por %p31, %p32
      %p34 = scmp.ne.s32.totalorder %s23, %s26
      %p35 = scmp.eq.s32.totalorder %s18, 1
      %p36 = por %p34, %p35
      %p37 = scmp.ne.s32.totalorder %s26, %s27
      %p38 = scmp.eq.s32.totalorder %s18, 0
      %p39 = por %p37, %p38
      %p40 = scmp.ne.s32.totalorder %s26, %s27
      %p41 = scmp.eq.s32.totalorder %s19, 1
      %p42 = por %p40, %p41
      %p44 = scmp.ne.s32.totalorder %s27, %s43
      %p45 = scmp.eq.s32.totalorder %s19, 0
      %p46 = por %p44, %p45
      %s48 = sadd.s32 %s47, 1
      %p51 = scmp.eq.s32.totalorder %s13, 1
      %p52 = scmp.ne.s32.totalorder %s47, %s49
      %p53 = scmp.eq.s32.totalorder %s13, 0
      %p54 = por %p52, %p53
      %p55 = scmp.ne.s32.totalorder %s47, %s49
      %p56 = scmp.eq.s32.totalorder %s18, 1
      %p57 = por %p55, %p56
      %p58 = scmp.ne.s32.totalorder %s49, %s50
      %p59 = scmp.eq.s32.totalorder %s18, 0
      %p60 = por %p58, %p59
      %p61 = scmp.ne.s32.totalorder %s49, %s50
      %p62 = scmp.eq.s32.totalorder %s19, 1
      %p63 = por %p61, %p62
      %p65 = scmp.ne.s32.totalorder %s50, %s64
      %p66 = scmp.eq.s32.totalorder %s19, 0
      %p67 = por %p65, %p66
      %s69 = sadd.s32 %s68, 1
      %p72 = scmp.eq.s32.totalorder %s13, 1
      %p73 = scmp.ne.s32.totalorder %s68, %s70
      %p74 = scmp.eq.s32.totalorder %s13, 0
      %p75 = por %p73, %p74
      %p76 = scmp.ne.s32.totalorder %s68, %s70
      %p77 = scmp.eq.s32.totalorder %s18, 1
      %p78 = por %p76, %p77
      %p79 = scmp.ne.s32.totalorder %s70, %s71
      %p80 = scmp.eq.s32.totalorder %s18, 0
      %p81 = por %p79, %p80
      %p82 = scmp.ne.s32.totalorder %s70, %s71
      %p83 = scmp.eq.s32.totalorder %s19, 1
      %p84 = por %p82, %p83
      %p86 = scmp.ne.s32.totalorder %s71, %s85
      %p87 = scmp.eq.s32.totalorder %s19, 0
      %p88 = por %p86, %p87
      %s89 = ssub.s32 %s13, %s20
      %p90 = scmp.eq.s32.totalorder %s89, 0
      %s92 = sadd.s32 %s91, 1
      %s93 = scalar_select %p90, %s91, %s92
      %p96 = pneg %p90
      %p97 = scmp.eq.s32.totalorder %s13, 1
      %p98 = por %p96, %p97
      %p99 = scmp.ne.s32.totalorder %s91, %s94
      %p100 = scmp.eq.s32.totalorder %s13, 0
      %p101 = por %p99, %p100
      %p102 = scmp.ne.s32.totalorder %s91, %s94
      %p103 = scmp.eq.s32.totalorder %s18, 1
      %p104 = por %p102, %p103
      %p105 = scmp.ne.s32.totalorder %s94, %s95
      %p106 = scmp.eq.s32.totalorder %s18, 0
      %p107 = por %p105, %p106
      %p108 = scmp.ne.s32.totalorder %s94, %s95
      %p109 = scmp.eq.s32.totalorder %s19, 1
      %p110 = por %p108, %p109
      %p112 = scmp.ne.s32.totalorder %s95, %s111
      %p113 = scmp.eq.s32.totalorder %s19, 0
      %p114 = por %p112, %p113
      %s115 = ssub.s32 %s13, %s20
      %p116 = scmp.eq.s32.totalorder %s115, 0
      %s118 = sadd.s32 %s117, 1
      %s119 = scalar_select %p116, %s117, %s118
      %p122 = pneg %p116
      %p123 = scmp.eq.s32.totalorder %s13, 1
      %p124 = por %p122, %p123
      %p125 = scmp.ne.s32.totalorder %s117, %s120
      %p126 = scmp.eq.s32.totalorder %s13, 0
      %p127 = por %p125, %p126
      %p128 = scmp.ne.s32.totalorder %s117, %s120
      %p129 = scmp.eq.s32.totalorder %s18, 1
      %p130 = por %p128, %p129
      %p131 = scmp.ne.s32.totalorder %s120, %s121
      %p132 = scmp.eq.s32.totalorder %s18, 0
      %p133 = por %p131, %p132
      %p134 = scmp.ne.s32.totalorder %s120, %s121
      %p135 = scmp.eq.s32.totalorder %s19, 1
      %p136 = por %p134, %p135
      %p138 = scmp.ne.s32.totalorder %s121, %s137
      %p139 = scmp.eq.s32.totalorder %s19, 0
      %p140 = por %p138, %p139
      %p141 = scmp.le.s32.totalorder 1, %s13
      %p142 = scmp.lt.s32.totalorder %s13, 3
      %p143 = pnand %p141, %p142
      %p144 = pneg %p143
      // Predicated region
      $region9: #{block_forward.7} parent=5 // pred_check
        _
      $region10: #{block_forward.7} parent=5 // pred_check_branch
        %146 = sbr.rel (%p143) target = $region12
      $region11: #{block_forward.7} parent=5 // pred_region
        %s147 = ssub.s32 %s13, 1
        // Predicated region
        $region13: #{block_forward.7} parent=11 // pred_check
          %p148 = pneg %p60
        $region14: #{block_forward.7} parent=11 // pred_check_branch
          %150 = sbr.rel (%p148) target = $region16
        $region15: #{block_forward.7} parent=11 // pred_region
          _
        $region16: #{block_forward.7} parent=11 // pred_fallthru
          _
        // Predicated region
        $region17: #{block_forward.7} parent=11 // pred_check
          %p151 = pneg %p81
        $region18: #{block_forward.7} parent=11 // pred_check_branch
          %153 = sbr.rel (%p151) target = $region20
        $region19: #{block_forward.7} parent=11 // pred_region
          _
        $region20: #{block_forward.7} parent=11 // pred_fallthru
          _
      $region12: #{block_forward.7} parent=5 // pred_fallthru
        _
      %p154 = scmp.lt.s32.totalorder %s13, 2
      // Predicated region
      $region21: #{block_forward.7} parent=5 // pred_check
        %p155 = pneg %p154
      $region22: #{block_forward.7} parent=5 // pred_check_branch
        %157 = sbr.rel (%p155) target = $region24
      $region23: #{block_forward.7} parent=5 // pred_region
        // Predicated region
        $region25: #{block_forward.7} parent=23 // pred_check
          %p158 = pneg %p33
        $region26: #{block_forward.7} parent=23 // pred_check_branch
          %160 = sbr.rel (%p158) target = $region28
        $region27: #{block_forward.7} parent=23 // pred_region
          %s161 = smul.u32 8, %s13
          %p162 = scmp.lt.s32.totalorder %s161, 15
          %s163 = scalar_select %p162, %s161, 15
          %s164 = smul.addr %s163, 4
          %s165 = scalar_lea.vmem %s0, %s164
          %s166 = smul.u32 8, %s13
        $region28: #{block_forward.7} parent=23 // pred_fallthru
          _
        // Predicated region
        $region29: #{block_forward.7} parent=23 // pred_check
          %p167 = pneg %p101
        $region30: #{block_forward.7} parent=23 // pred_check_branch
          %169 = sbr.rel (%p167) target = $region32
        $region31: #{block_forward.7} parent=23 // pred_region
          %s170 = smul.u32 8, %s13
          %p171 = scmp.lt.s32.totalorder %s170, 15
          %s172 = scalar_select %p171, %s170, 15
          %s173 = smul.addr %s172, 4
          %s174 = scalar_lea.vmem %s3, %s173
          %s175 = smul.u32 8, %s13
        $region32: #{block_forward.7} parent=23 // pred_fallthru
          _
      $region24: #{block_forward.7} parent=5 // pred_fallthru
        _
      %p176 = scmp.le.s32.totalorder 1, %s13
      %p177 = scmp.lt.s32.totalorder %s13, 3
      %p178 = pnand %p176, %p177
      %p179 = pneg %p178
      // Predicated region
      $region33: #{block_forward.7} parent=5 // pred_check
        _
      $region34: #{block_forward.7} parent=5 // pred_check_branch
        %181 = sbr.rel (%p178) target = $region36
      $region35: #{block_forward.7} parent=5 // pred_region
        %s182 = ssub.s32 %s13, 1
        %s183 = smul.u32 8, %s18
        %p184 = scmp.lt.s32.totalorder %s183, 15
        %s185 = scalar_select %p184, %s183, 15
        %s186 = smul.addr %s185, 4
        %s187 = scalar_lea.vmem %s0, %s186
        %p188 = pneg %p39
        %p189 = pneg %p36
        %p190 = pneg %p60
        %p191 = pneg %p57
        %p192 = pneg %p81
        %p193 = pneg %p78
        %s194 = smul.u32 8, %s18
        %p195 = scmp.lt.s32.totalorder %s194, 15
        %s196 = scalar_select %p195, %s194, 15
        %s197 = smul.addr %s196, 4
        %s198 = scalar_lea.vmem %s3, %s197
        %p199 = pneg %p107
        %p200 = pneg %p104
        %p201 = pneg %p133
        %p202 = pneg %p130
        %s203 = sand.u32 %s120, 1
        %s204 = scalar_lea.sflag [#allocation3], %s203
        %s205 = sand.u32 %s120, 1
        %s206 = smul.addr %s205, 64
        %s207 = scalar_lea.vmem [#allocation2], %s206
        %s208 = smul.u32 8, %s18
        %p209 = scmp.lt.s32.totalorder %s208, 15
        %s210 = scalar_select %p209, %s208, 15
        %s211 = smul.addr %s210, 4
        %s212 = scalar_lea.vmem %s0, %s211
        %s213 = smul.u32 8, %s18
        %s214 = smul.u32 8, %s18
        %p215 = scmp.lt.s32.totalorder %s214, 15
        %s216 = scalar_select %p215, %s214, 15
        %s217 = smul.addr %s216, 4
        %s218 = scalar_lea.vmem %s3, %s217
        %s219 = smul.u32 8, %s18
        %s220 = smul.u32 8, %s18
        %v221 = vld [vmem:[%s212] sm:$0xf]
        %v222 = vld [vmem:[%s212 + $0x4] sm:$0xf]
        %v223 = vld [vmem:[%s212 + $0x8] sm:$0xf]
        %v224 = vld [vmem:[%s212 + $0xc] sm:$0xf]
        %v225 = vld [vmem:[%s212 + $0x10] sm:$0xf]
        %v226 = vld [vmem:[%s212 + $0x14] sm:$0xf]
        %v227 = vld [vmem:[%s212 + $0x18] sm:$0xf]
        %v228 = vld [vmem:[%s212 + $0x1c] sm:$0xf]
        %v229 = vunpack.c.l.bf16 %v221
        %v230 = vunpack.c.l.bf16 %v222
        %v231 = vunpack.c.l.bf16 %v223
        %v232 = vunpack.c.l.bf16 %v224
        %v233 = vunpack.c.l.bf16 %v225
        %v234 = vunpack.c.l.bf16 %v226
        %v235 = vunpack.c.l.bf16 %v227
        %v236 = vunpack.c.l.bf16 %v228
        %v237 = vld [vmem:[%s1] sm:$0x1]
        %v239 = vlaneseq
        %v240 = vshrl.u32 %v239, 7
        %v241 = vsub.s32 0, %v240
        %v242 = vrot.slane %v237, %v241
        %v244 = vmul.f32 %v229, %v242
        %v245 = vmul.f32 %v230, %v242
        %v246 = vmul.f32 %v231, %v242
        %v247 = vmul.f32 %v232, %v242
        %v248 = vmul.f32 %v233, %v242
        %v249 = vmul.f32 %v234, %v242
        %v250 = vmul.f32 %v235, %v242
        %v251 = vmul.f32 %v236, %v242
        %v252 = vld [vmem:[%s2] sm:$0x1]
        %v254 = vlaneseq
        %v255 = vshrl.u32 %v254, 7
        %v256 = vsub.s32 0, %v255
        %v257 = vrot.slane %v252, %v256
        %v259 = vadd.f32 %v244, %v257
        %v260 = vadd.f32 %v245, %v257
        %v261 = vadd.f32 %v246, %v257
        %v262 = vadd.f32 %v247, %v257
        %v263 = vadd.f32 %v248, %v257
        %v264 = vadd.f32 %v249, %v257
        %v265 = vadd.f32 %v250, %v257
        %v266 = vadd.f32 %v251, %v257
        %v267 = vld [vmem:[%s218] sm:$0xf]
        %v268 = vld [vmem:[%s218 + $0x4] sm:$0xf]
        %v269 = vld [vmem:[%s218 + $0x8] sm:$0xf]
        %v270 = vld [vmem:[%s218 + $0xc] sm:$0xf]
        %v271 = vld [vmem:[%s218 + $0x10] sm:$0xf]
        %v272 = vld [vmem:[%s218 + $0x14] sm:$0xf]
        %v273 = vld [vmem:[%s218 + $0x18] sm:$0xf]
        %v274 = vld [vmem:[%s218 + $0x1c] sm:$0xf]
        %v275 = vunpack.c.l.bf16 %v267
        %v276 = vunpack.c.l.bf16 %v268
        %v277 = vunpack.c.l.bf16 %v269
        %v278 = vunpack.c.l.bf16 %v270
        %v279 = vunpack.c.l.bf16 %v271
        %v280 = vunpack.c.l.bf16 %v272
        %v281 = vunpack.c.l.bf16 %v273
        %v282 = vunpack.c.l.bf16 %v274
        %v283 = vadd.f32 %v259, %v275
        %v284 = vadd.f32 %v260, %v276
        %v285 = vadd.f32 %v261, %v277
        %v286 = vadd.f32 %v262, %v278
        %v287 = vadd.f32 %v263, %v279
        %v288 = vadd.f32 %v264, %v280
        %v289 = vadd.f32 %v265, %v281
        %v290 = vadd.f32 %v266, %v282
        %v291 = vmax.f32 %v283, 0.0
        %v292 = vmax.f32 %v284, 0.0
        %v293 = vmax.f32 %v285, 0.0
        %v294 = vmax.f32 %v286, 0.0
        %v295 = vmax.f32 %v287, 0.0
        %v296 = vmax.f32 %v288, 0.0
        %v297 = vmax.f32 %v289, 0.0
        %v298 = vmax.f32 %v290, 0.0
        %299 = vst [vmem:[%s207] sm:$0xff] %v291
        %300 = vst [vmem:[%s207 + $0x8] sm:$0xff] %v292
        %301 = vst [vmem:[%s207 + $0x10] sm:$0xff] %v293
        %302 = vst [vmem:[%s207 + $0x18] sm:$0xff] %v294
        %303 = vst [vmem:[%s207 + $0x20] sm:$0xff] %v295
        %304 = vst [vmem:[%s207 + $0x28] sm:$0xff] %v296
        %305 = vst [vmem:[%s207 + $0x30] sm:$0xff] %v297
        %306 = vst [vmem:[%s207 + $0x38] sm:$0xff] %v298
        %s307 = sand.u32 %s120, 1
        %s308 = scalar_lea.sflag [#allocation3], %s307
        %s309 = sand.u32 %s120, 1
        %s310 = smul.addr %s309, 64
        %s311 = scalar_lea.vmem [#allocation2], %s310
        // Predicated region
        $region37: #{block_forward.7} parent=35 // pred_check
          %p312 = pneg %p130
        $region38: #{block_forward.7} parent=35 // pred_check_branch
          %314 = sbr.rel (%p312) target = $region40
        $region39: #{block_forward.7} parent=35 // pred_region
          %s315 = smul.u32 8, %s18
          %s317 = ssub.s32 1024, 1024
          %318 = vsyncadd %s308, %s317
          %s319 = smul.addr %s315, 128
          %s320 = scalar_lea.hbm %s4, %s319
          %s321 = sshll.u32 %s311, 4
          %s322 = int_to_ptr.vmem [resolvable:$true] %s321
          %327 = dma.vmem_to_hbm [thread:$0]  %s322, 1024, %s320, %s308, 128, 128, 8
        $region40: #{block_forward.7} parent=35 // pred_fallthru
          _
      $region36: #{block_forward.7} parent=5 // pred_fallthru
        _
      %p328 = scmp.le.s32.totalorder 2, %s13
      // Predicated region
      $region41: #{block_forward.7} parent=5 // pred_check
        %p329 = pneg %p328
      $region42: #{block_forward.7} parent=5 // pred_check_branch
        %331 = sbr.rel (%p329) target = $region44
      $region43: #{block_forward.7} parent=5 // pred_region
        %s332 = ssub.s32 %s13, 2
        // Predicated region
        $region45: #{block_forward.7} parent=43 // pred_check
          %p333 = pneg %p136
        $region46: #{block_forward.7} parent=43 // pred_check_branch
          %335 = sbr.rel (%p333) target = $region48
        $region47: #{block_forward.7} parent=43 // pred_region
          %s336 = sand.u32 %s121, 1
          %s337 = scalar_lea.sflag [#allocation3], %s336
          %s338 = sand.u32 %s121, 1
          %s339 = smul.addr %s338, 64
          %s340 = scalar_lea.vmem [#allocation2], %s339
          %341 = dma.done %s337, 1024
        $region48: #{block_forward.7} parent=43 // pred_fallthru
          _
      $region44: #{block_forward.7} parent=5 // pred_fallthru
        _
    $region6: #{block_forward.7} parent=1 // loop_footer
      %s17 = sadd.s32 1, %s13
    $region7: #{block_forward.7} parent=1 // loop_footer_branch
      %12 = sbr.rel target = $region3
    $region8: #{block_forward.7} parent=1 // loop_exit
      _
    %342 = vsyncpa [#allocation3], 1
    %s343 = scalar_lea.sflag [#allocation3], 1
    %344 = vsyncpa %s343, 1

</llo_original>
